<compile_context>
chip_gen: v7x
topology: tpu7x:2x2x1
jax: 0.10.0
libtpu: 0.0.40
codegen_flags: <defaults>
</compile_context>

<pallas_src>
import functools

import jax
import jax.numpy as jnp
from jax import lax
from jax.experimental import pallas as pl
from jax.experimental.pallas import tpu as pltpu

# ----- module hyper-parameters (from MultiBoxLoss.__init__) -----
ALPHA = 0.1          # label smoothing
BETA_LOC = 1.0
BETA_CNF = 1.0
BETA_REG = 1.0
VARIANCE = 0.1
THRESHOLD = 0.5      # min_overlap
NEG_POS = 3          # negpos_ratio
N_CLASSES = 4        # one_hot depth is hard-coded to 4 in the module

# ----- row layout of the packed (B, 16, P) input slab -----
_R_CNF = 0           # rows 0..3 : confidence logits (class-major)
_R_LOCP = 4          # rows 4..5 : localization predictions
_R_LOCT = 6          # rows 6..7 : localization targets
_R_REGP = 8          # row  8    : regression prediction
_R_REGT = 9          # row  9    : regression target
_R_CNFT = 10         # row 10    : matched class id (stored as f32, exact)
_PACK_ROWS = 16      # padded to two full 8-sublane tiles


def _smooth_l1(d):
    ad = jnp.abs(d)
    return jnp.where(ad < 1.0, 0.5 * d * d, ad - 0.5)


# =====================================================================
# Pallas kernel: all loss math for one block of `bt` images.
# =====================================================================
def _multibox_loss_kernel(packed_ref, out_ref, *, bt):
    P = packed_ref.shape[-1]
    x = packed_ref[...]                                      # (bt, 16, P) f32

    loc_p = x[:, _R_LOCP:_R_LOCP + 2, :]                     # (bt, 2, P)
    loc_t = x[:, _R_LOCT:_R_LOCT + 2, :]                     # (bt, 2, P)
    reg_p = x[:, _R_REGP:_R_REGP + 1, :]                     # (bt, 1, P)
    reg_t = x[:, _R_REGT:_R_REGT + 1, :]                     # (bt, 1, P)
    cnf_ti = x[:, _R_CNFT:_R_CNFT + 1, :].astype(jnp.int32)  # (bt, 1, P)

    pos = cnf_ti > 0
    posf = pos.astype(jnp.float32)                           # (bt, 1, P)

    # smooth-L1 terms, already masked to positive priors
    sl_loc = _smooth_l1(loc_p - loc_t) * posf                # (bt, 2, P)
    sl_reg = _smooth_l1(reg_p - reg_t) * posf                # (bt, 1, P)

    # ---- per-prior softmax-CE surrogate (ranks negatives) and BCE, with the
    #      class axis unrolled statically: everything stays elementwise on
    #      (bt, 1, P) tiles (no cross-sublane reductions needed here) ----
    c_rows = [x[:, _R_CNF + k:_R_CNF + k + 1, :] for k in range(N_CLASSES)]
    eq = [(cnf_ti == k).astype(jnp.float32) for k in range(N_CLASSES)]

    cmax = c_rows[0]
    for k in range(1, N_CLASSES):
        cmax = jnp.maximum(cmax, c_rows[k])

    expsum = jnp.zeros_like(cmax)
    gathered = jnp.zeros_like(cmax)
    bce_sum = jnp.zeros_like(cmax)       # BCE-with-logits, pre-summed over C
    for k in range(N_CLASSES):
        ck = c_rows[k]
        expsum = expsum + jnp.exp(ck - cmax)
        gathered = gathered + ck * eq[k]
        # label-smoothed one-hot target (alpha tied to the class count)
        tgt_k = eq[k] * (1.0 - ALPHA) + ALPHA / N_CLASSES
        z = jnp.exp(-jnp.abs(ck))
        log_term = jnp.log(1.0 + z)
        log_term = jnp.where(z < 1e-6, z, log_term)          # log1p-accurate tail
        bce_sum = bce_sum + jnp.maximum(ck, 0.0) - ck * tgt_k + log_term

    lse = jnp.log(expsum) + cmax
    lmine = jnp.where(pos, 0.0, lse - gathered)              # (bt, 1, P), loss_c[pos]=0

    # ---- per-image hard-negative mining + scalar reductions ----
    qi = lax.broadcasted_iota(jnp.int32, (P, P), 0)          # q on sublanes
    pi = lax.broadcasted_iota(jnp.int32, (P, P), 1)          # p on lanes
    diag = qi == pi
    rowi = lax.broadcasted_iota(jnp.int32, (8, 128), 0)
    lanei = lax.broadcasted_iota(jnp.int32, (8, 128), 1)
    slab = jnp.zeros((8, 128), jnp.float32)

    for b in range(bt):                                      # bt is small & static
        row = lmine[b]                                       # (1, P) lane-major
        big = jnp.broadcast_to(row, (P, P))                  # big[q, p] = lmine[p]
        # lane-major -> sublane-major without a transpose: pick the diagonal
        col = jnp.sum(jnp.where(diag, big, 0.0), axis=1, keepdims=True)   # (P, 1)
        # stable-descending-sort rank:
        # rank[p] = #{q != p : lmine[q] > lmine[p] or (== and q < p)}
        before = jnp.logical_or(col > row,
                                jnp.logical_and(col == row, qi < pi))     # (P, P)
        rank = jnp.sum(before.astype(jnp.float32), axis=0, keepdims=True) # (1, P)

        num_pos_b = jnp.sum(posf[b])
        num_neg_b = jnp.minimum(float(NEG_POS) * num_pos_b, float(P - 1))
        sel = jnp.logical_or(pos[b], rank < num_neg_b).astype(jnp.float32)

        loss_l_b = jnp.sum(sl_loc[b])
        loss_c_b = jnp.sum(bce_sum[b] * sel)
        loss_r_b = jnp.sum(sl_reg[b])

        slab = slab + jnp.where(
            rowi == b,
            jnp.where(lanei == 0, loss_l_b,
            jnp.where(lanei == 1, loss_c_b,
            jnp.where(lanei == 2, loss_r_b,
            jnp.where(lanei == 3, num_pos_b, 0.0)))),
            0.0)

    out_ref[0] = slab                                        # one contiguous (8,128) store


def _pick_bt(batch, cap=8):
    """Largest images-per-block <= cap dividing batch while keeping >= 2 grid
    blocks whenever batch >= 2 (so both v7x TensorCores get work)."""
    if batch <= 1:
        return 1
    best = 1
    for bt in range(1, min(cap, batch // 2) + 1):
        if batch % bt == 0:
            best = bt
    return best


def multibox_loss_pallas(loc_data, cnf_data, reg_data, loc_t, cnf_t, reg_t):
    """loc_data (B,P,2), cnf_data (B,P,C), reg_data (B,P,1); truths likewise."""
    B, P, C = cnf_data.shape
    assert C == N_CLASSES and P % 128 == 0

    # Pack every per-prior tensor into ONE (B, 16, P) f32 slab (prior axis on
    # the 128-lane dimension) -> a single input DMA per grid step.
    packed = jnp.concatenate([
        jnp.transpose(cnf_data, (0, 2, 1)).astype(jnp.float32),   # rows 0..3
        jnp.transpose(loc_data, (0, 2, 1)).astype(jnp.float32),   # rows 4..5
        jnp.transpose(loc_t, (0, 2, 1)).astype(jnp.float32),      # rows 6..7
        jnp.transpose(reg_data, (0, 2, 1)).astype(jnp.float32),   # row 8
        jnp.transpose(reg_t, (0, 2, 1)).astype(jnp.float32),      # row 9
        cnf_t.astype(jnp.float32)[:, None, :],                    # row 10
        jnp.zeros((B, _PACK_ROWS - 11, P), jnp.float32),          # rows 11..15
    ], axis=1)                                                    # (B, 16, P)

    bt = _pick_bt(B)
    nblk = B // bt

    # advisory cost hint so XLA overlaps this tiny custom call
    flops = int(B * (6 * P * P + 40 * N_CLASSES * P + 40 * P))
    transc = int(B * (2 * N_CLASSES + 2) * P)
    bytes_acc = int(packed.size * 4 + nblk * 8 * 128 * 4)

    kernel = functools.partial(_multibox_loss_kernel, bt=bt)
    partial = pl.pallas_call(
        kernel,
        out_shape=jax.ShapeDtypeStruct((nblk, 8, 128), jnp.float32),
        grid=(nblk,),
        in_specs=[pl.BlockSpec((bt, _PACK_ROWS, P), lambda i: (i, 0, 0))],
        out_specs=pl.BlockSpec((1, 8, 128), lambda i: (i, 0, 0)),
        compiler_params=pltpu.CompilerParams(
            dimension_semantics=("parallel",)),
        cost_estimate=pl.CostEstimate(
            flops=flops, transcendentals=transc, bytes_accessed=bytes_acc),
    )(packed)

    # tiny epilogue: sum per-image partials over batch and normalize by N.
    sums = jnp.sum(partial, axis=(0, 1))                     # (128,)
    # NOTE: the PyTorch original divides by N = sum(num_pos) unguarded and
    # produces inf/nan when no prior is positive; we guard with max(N, 1).
    n = jnp.maximum(sums[3], 1.0)
    inv_n = 1.0 / n
    return (BETA_LOC * sums[0] * inv_n,
            BETA_CNF * sums[1] * inv_n,
            BETA_REG * sums[2] * inv_n)


# =====================================================================
# Glue: ground-truth <-> prior matching (reconstruction of box_utils.match)
# =====================================================================
def _jaccard(box_a, box_b):
    """box_a (O,4), box_b (P,4), corner form -> IoU (O,P)."""
    max_xy = jnp.minimum(box_a[:, None, 2:], box_b[None, :, 2:])
    min_xy = jnp.maximum(box_a[:, None, :2], box_b[None, :, :2])
    wh = jnp.maximum(max_xy - min_xy, 0.0)
    inter = wh[..., 0] * wh[..., 1]
    area_a = ((box_a[:, 2] - box_a[:, 0]) * (box_a[:, 3] - box_a[:, 1]))[:, None]
    area_b = ((box_b[:, 2] - box_b[:, 0]) * (box_b[:, 3] - box_b[:, 1]))[None, :]
    return inter / (area_a + area_b - inter)


def _match_single(truths, labels, regres, priors):
    # TODO(synk): `match` lives in ssd/layers/box_utils.py and was not provided;
    # this is a standard-SSD-style reconstruction emitting 2-d center offsets
    # to fit loc_truth's (P, 2) shape used by the module.
    priors_pf = jnp.concatenate([priors[:, :2] - priors[:, 2:] / 2.0,
                                 priors[:, :2] + priors[:, 2:] / 2.0], axis=1)
    overlaps = _jaccard(truths, priors_pf)              # (O, P)
    best_prior_idx = jnp.argmax(overlaps, axis=1)       # (O,)
    best_truth_overlap = jnp.max(overlaps, axis=0)      # (P,)
    best_truth_idx = jnp.argmax(overlaps, axis=0)       # (P,)
    best_truth_overlap = best_truth_overlap.at[best_prior_idx].set(2.0)
    best_truth_idx = best_truth_idx.at[best_prior_idx].set(
        jnp.arange(truths.shape[0]))
    matched = truths[best_truth_idx]                    # (P, 4)
    conf = labels[best_truth_idx].astype(jnp.int32) + 1
    conf = jnp.where(best_truth_overlap < THRESHOLD, 0, conf)
    g_c = ((matched[:, :2] + matched[:, 2:]) / 2.0 - priors[:, :2]) \
          / (VARIANCE * priors[:, 2:])                  # (P, 2)
    reg = regres[best_truth_idx]                        # (P, 1)
    return g_c, conf, reg


def multibox_loss_forward(priors, predictions, targets):
    loc_data, cnf_data, reg_data = predictions
    truths = targets[:, :, :4]
    labels = targets[:, :, 4]
    regres = targets[:, :, 5:6]
    loc_t, cnf_t, reg_t = jax.vmap(
        _match_single, in_axes=(0, 0, 0, None))(truths, labels, regres, priors)
    return multibox_loss_pallas(loc_data, cnf_data, reg_data, loc_t, cnf_t, reg_t)


def make_priors(P=128):
    """Deterministic prior grid in center form (cx, cy, w, h), P = 16*8."""
    gx, gy = 16, 8
    xs = (jnp.arange(gx, dtype=jnp.float32) + 0.5) / gx
    ys = (jnp.arange(gy, dtype=jnp.float32) + 0.5) / gy
    cx, cy = jnp.meshgrid(xs, ys, indexing="ij")
    cx = cx.reshape(-1)
    cy = cy.reshape(-1)
    w = jnp.full_like(cx, 2.0 / gx)
    h = jnp.full_like(cy, 2.0 / gy)
    priors = jnp.stack([cx, cy, w, h], axis=1)
    assert priors.shape[0] == P
    return priors


if __name__ == "__main__":
    bs, P, O = 2, 128, 3
    priors = make_priors(P)

    key = jax.random.PRNGKey(0)
    k1, k2, k3, k4, k5, k6, k7 = jax.random.split(key, 7)

    # targets: (bs, num_objs, 6) = [xmin, ymin, xmax, ymax, label, reg_value]
    centers = jax.random.uniform(k1, (bs, O, 2), minval=0.2, maxval=0.8)
    sizes = jax.random.uniform(k2, (bs, O, 2), minval=0.15, maxval=0.30)
    boxes = jnp.concatenate([centers - sizes / 2, centers + sizes / 2], axis=-1)
    labels = jax.random.randint(k3, (bs, O, 1), 0, N_CLASSES - 1).astype(jnp.float32)
    regres = jax.random.uniform(k4, (bs, O, 1))
    targets = jnp.concatenate([boxes, labels, regres], axis=-1)

    # predictions: loc (bs,P,2), cnf (bs,P,4), reg (bs,P,1)
    loc_data = 0.1 * jax.random.normal(k5, (bs, P, 2), jnp.float32)
    cnf_data = jax.random.normal(k6, (bs, P, N_CLASSES), jnp.float32)
    reg_data = jax.random.normal(k7, (bs, P, 1), jnp.float32)

    fwd = jax.jit(functools.partial(multibox_loss_forward, priors))
    loss_l, loss_c, loss_r = fwd((loc_data, cnf_data, reg_data), targets)
    jax.block_until_ready((loss_l, loss_c, loss_r))
    print("KERNEL_OK")
</pallas_src>

<mosaic_0001>
module attributes {stable_mosaic.version = 11 : i64} {
  func.func @_multibox_loss_kernel(%arg0: i32, %arg1: memref<1x16x128xf32, #tpu.memory_space<vmem>>, %arg2: memref<1x8x128xf32, #tpu.memory_space<vmem>>) attributes {dimension_semantics = [#tpu.dimension_semantics<parallel>], iteration_bounds = array<i64: 2>, scalar_prefetch = 0 : i64, scratch_operands = 0 : i64, tpu.core_type = #tpu.core_type<tc>, window_params = [{transform_indices = @transform_0, window_bounds = array<i64: 1, 16, 128>}, {transform_indices = @transform_1, window_bounds = array<i64: 1, 8, 128>}]} {
    %c0 = arith.constant 0 : index
    %c0_0 = arith.constant 0 : index
    %c0_1 = arith.constant 0 : index
    %0 = vector.load %arg1[%c0, %c0_0, %c0_1] : memref<1x16x128xf32, #tpu.memory_space<vmem>>, vector<1x16x128xf32>
    %1 = vector.extract_strided_slice %0 {offsets = [0, 4, 0], sizes = [1, 2, 128], strides = [1, 1, 1]} : vector<1x16x128xf32> to vector<1x2x128xf32>
    %2 = vector.extract_strided_slice %0 {offsets = [0, 6, 0], sizes = [1, 2, 128], strides = [1, 1, 1]} : vector<1x16x128xf32> to vector<1x2x128xf32>
    %3 = vector.extract_strided_slice %0 {offsets = [0, 8, 0], sizes = [1, 1, 128], strides = [1, 1, 1]} : vector<1x16x128xf32> to vector<1x1x128xf32>
    %4 = vector.extract_strided_slice %0 {offsets = [0, 9, 0], sizes = [1, 1, 128], strides = [1, 1, 1]} : vector<1x16x128xf32> to vector<1x1x128xf32>
    %5 = vector.extract_strided_slice %0 {offsets = [0, 10, 0], sizes = [1, 1, 128], strides = [1, 1, 1]} : vector<1x16x128xf32> to vector<1x1x128xf32>
    %6 = arith.fptosi %5 : vector<1x1x128xf32> to vector<1x1x128xi32>
    %c0_i32 = arith.constant 0 : i32
    %7 = vector.broadcast %c0_i32 : i32 to vector<1x1x128xi32>
    %8 = arith.cmpi sgt, %6, %7 : vector<1x1x128xi32>
    %9 = arith.extui %8 : vector<1x1x128xi1> to vector<1x1x128xi32>
    %10 = arith.sitofp %9 : vector<1x1x128xi32> to vector<1x1x128xf32>
    %11 = arith.subf %1, %2 : vector<1x2x128xf32>
    %12 = math.absf %11 : vector<1x2x128xf32>
    %cst = arith.constant 1.000000e+00 : f32
    %13 = vector.broadcast %cst : f32 to vector<1x2x128xf32>
    %14 = arith.cmpf olt, %12, %13 : vector<1x2x128xf32>
    %cst_2 = arith.constant 5.000000e-01 : f32
    %15 = vector.broadcast %cst_2 : f32 to vector<1x2x128xf32>
    %16 = arith.mulf %15, %11 : vector<1x2x128xf32>
    %17 = arith.mulf %16, %11 : vector<1x2x128xf32>
    %cst_3 = arith.constant 5.000000e-01 : f32
    %18 = vector.broadcast %cst_3 : f32 to vector<1x2x128xf32>
    %19 = arith.subf %12, %18 : vector<1x2x128xf32>
    %20 = arith.select %14, %17, %19 : vector<1x2x128xi1>, vector<1x2x128xf32>
    %21 = vector.broadcast %10 : vector<1x1x128xf32> to vector<1x2x128xf32>
    %22 = arith.mulf %20, %21 : vector<1x2x128xf32>
    %23 = arith.subf %3, %4 : vector<1x1x128xf32>
    %24 = math.absf %23 : vector<1x1x128xf32>
    %cst_4 = arith.constant 1.000000e+00 : f32
    %25 = vector.broadcast %cst_4 : f32 to vector<1x1x128xf32>
    %26 = arith.cmpf olt, %24, %25 : vector<1x1x128xf32>
    %cst_5 = arith.constant 5.000000e-01 : f32
    %27 = vector.broadcast %cst_5 : f32 to vector<1x1x128xf32>
    %28 = arith.mulf %27, %23 : vector<1x1x128xf32>
    %29 = arith.mulf %28, %23 : vector<1x1x128xf32>
    %cst_6 = arith.constant 5.000000e-01 : f32
    %30 = vector.broadcast %cst_6 : f32 to vector<1x1x128xf32>
    %31 = arith.subf %24, %30 : vector<1x1x128xf32>
    %32 = arith.select %26, %29, %31 : vector<1x1x128xi1>, vector<1x1x128xf32>
    %33 = arith.mulf %32, %10 : vector<1x1x128xf32>
    %34 = vector.extract_strided_slice %0 {offsets = [0, 0, 0], sizes = [1, 1, 128], strides = [1, 1, 1]} : vector<1x16x128xf32> to vector<1x1x128xf32>
    %35 = vector.extract_strided_slice %0 {offsets = [0, 1, 0], sizes = [1, 1, 128], strides = [1, 1, 1]} : vector<1x16x128xf32> to vector<1x1x128xf32>
    %36 = vector.extract_strided_slice %0 {offsets = [0, 2, 0], sizes = [1, 1, 128], strides = [1, 1, 1]} : vector<1x16x128xf32> to vector<1x1x128xf32>
    %37 = vector.extract_strided_slice %0 {offsets = [0, 3, 0], sizes = [1, 1, 128], strides = [1, 1, 1]} : vector<1x16x128xf32> to vector<1x1x128xf32>
    %c0_i32_7 = arith.constant 0 : i32
    %38 = vector.broadcast %c0_i32_7 : i32 to vector<1x1x128xi32>
    %39 = arith.cmpi eq, %6, %38 : vector<1x1x128xi32>
    %40 = arith.extui %39 : vector<1x1x128xi1> to vector<1x1x128xi32>
    %41 = arith.sitofp %40 : vector<1x1x128xi32> to vector<1x1x128xf32>
    %c1_i32 = arith.constant 1 : i32
    %42 = vector.broadcast %c1_i32 : i32 to vector<1x1x128xi32>
    %43 = arith.cmpi eq, %6, %42 : vector<1x1x128xi32>
    %44 = arith.extui %43 : vector<1x1x128xi1> to vector<1x1x128xi32>
    %45 = arith.sitofp %44 : vector<1x1x128xi32> to vector<1x1x128xf32>
    %c2_i32 = arith.constant 2 : i32
    %46 = vector.broadcast %c2_i32 : i32 to vector<1x1x128xi32>
    %47 = arith.cmpi eq, %6, %46 : vector<1x1x128xi32>
    %48 = arith.extui %47 : vector<1x1x128xi1> to vector<1x1x128xi32>
    %49 = arith.sitofp %48 : vector<1x1x128xi32> to vector<1x1x128xf32>
    %c3_i32 = arith.constant 3 : i32
    %50 = vector.broadcast %c3_i32 : i32 to vector<1x1x128xi32>
    %51 = arith.cmpi eq, %6, %50 : vector<1x1x128xi32>
    %52 = arith.extui %51 : vector<1x1x128xi1> to vector<1x1x128xi32>
    %53 = arith.sitofp %52 : vector<1x1x128xi32> to vector<1x1x128xf32>
    %54 = arith.maximumf %34, %35 : vector<1x1x128xf32>
    %55 = arith.maximumf %54, %36 : vector<1x1x128xf32>
    %56 = arith.maximumf %55, %37 : vector<1x1x128xf32>
    %cst_8 = arith.constant 0.000000e+00 : f32
    %57 = vector.broadcast %cst_8 : f32 to vector<1x1x128xf32>
    %cst_9 = arith.constant 0.000000e+00 : f32
    %58 = vector.broadcast %cst_9 : f32 to vector<1x1x128xf32>
    %cst_10 = arith.constant 0.000000e+00 : f32
    %59 = vector.broadcast %cst_10 : f32 to vector<1x1x128xf32>
    %60 = arith.subf %34, %56 : vector<1x1x128xf32>
    %61 = math.exp %60 : vector<1x1x128xf32>
    %62 = arith.addf %57, %61 : vector<1x1x128xf32>
    %63 = arith.mulf %34, %41 : vector<1x1x128xf32>
    %64 = arith.addf %58, %63 : vector<1x1x128xf32>
    %cst_11 = arith.constant 0.899999976 : f32
    %65 = vector.broadcast %cst_11 : f32 to vector<1x1x128xf32>
    %66 = arith.mulf %41, %65 : vector<1x1x128xf32>
    %cst_12 = arith.constant 2.500000e-02 : f32
    %67 = vector.broadcast %cst_12 : f32 to vector<1x1x128xf32>
    %68 = arith.addf %66, %67 : vector<1x1x128xf32>
    %69 = math.absf %34 : vector<1x1x128xf32>
    %cst_13 = arith.constant 0.000000e+00 : f32
    %70 = vector.broadcast %cst_13 : f32 to vector<1x1x128xf32>
    %71 = arith.subf %70, %69 : vector<1x1x128xf32>
    %72 = math.exp %71 : vector<1x1x128xf32>
    %cst_14 = arith.constant 1.000000e+00 : f32
    %73 = vector.broadcast %cst_14 : f32 to vector<1x1x128xf32>
    %74 = arith.addf %73, %72 : vector<1x1x128xf32>
    %75 = math.log %74 : vector<1x1x128xf32>
    %cst_15 = arith.constant 9.99999997E-7 : f32
    %76 = vector.broadcast %cst_15 : f32 to vector<1x1x128xf32>
    %77 = arith.cmpf olt, %72, %76 : vector<1x1x128xf32>
    %78 = arith.select %77, %72, %75 : vector<1x1x128xi1>, vector<1x1x128xf32>
    %cst_16 = arith.constant 0.000000e+00 : f32
    %79 = vector.broadcast %cst_16 : f32 to vector<1x1x128xf32>
    %80 = arith.maximumf %34, %79 : vector<1x1x128xf32>
    %81 = arith.addf %59, %80 : vector<1x1x128xf32>
    %82 = arith.mulf %34, %68 : vector<1x1x128xf32>
    %83 = arith.subf %81, %82 : vector<1x1x128xf32>
    %84 = arith.addf %83, %78 : vector<1x1x128xf32>
    %85 = arith.subf %35, %56 : vector<1x1x128xf32>
    %86 = math.exp %85 : vector<1x1x128xf32>
    %87 = arith.addf %62, %86 : vector<1x1x128xf32>
    %88 = arith.mulf %35, %45 : vector<1x1x128xf32>
    %89 = arith.addf %64, %88 : vector<1x1x128xf32>
    %cst_17 = arith.constant 0.899999976 : f32
    %90 = vector.broadcast %cst_17 : f32 to vector<1x1x128xf32>
    %91 = arith.mulf %45, %90 : vector<1x1x128xf32>
    %cst_18 = arith.constant 2.500000e-02 : f32
    %92 = vector.broadcast %cst_18 : f32 to vector<1x1x128xf32>
    %93 = arith.addf %91, %92 : vector<1x1x128xf32>
    %94 = math.absf %35 : vector<1x1x128xf32>
    %cst_19 = arith.constant 0.000000e+00 : f32
    %95 = vector.broadcast %cst_19 : f32 to vector<1x1x128xf32>
    %96 = arith.subf %95, %94 : vector<1x1x128xf32>
    %97 = math.exp %96 : vector<1x1x128xf32>
    %cst_20 = arith.constant 1.000000e+00 : f32
    %98 = vector.broadcast %cst_20 : f32 to vector<1x1x128xf32>
    %99 = arith.addf %98, %97 : vector<1x1x128xf32>
    %100 = math.log %99 : vector<1x1x128xf32>
    %cst_21 = arith.constant 9.99999997E-7 : f32
    %101 = vector.broadcast %cst_21 : f32 to vector<1x1x128xf32>
    %102 = arith.cmpf olt, %97, %101 : vector<1x1x128xf32>
    %103 = arith.select %102, %97, %100 : vector<1x1x128xi1>, vector<1x1x128xf32>
    %cst_22 = arith.constant 0.000000e+00 : f32
    %104 = vector.broadcast %cst_22 : f32 to vector<1x1x128xf32>
    %105 = arith.maximumf %35, %104 : vector<1x1x128xf32>
    %106 = arith.addf %84, %105 : vector<1x1x128xf32>
    %107 = arith.mulf %35, %93 : vector<1x1x128xf32>
    %108 = arith.subf %106, %107 : vector<1x1x128xf32>
    %109 = arith.addf %108, %103 : vector<1x1x128xf32>
    %110 = arith.subf %36, %56 : vector<1x1x128xf32>
    %111 = math.exp %110 : vector<1x1x128xf32>
    %112 = arith.addf %87, %111 : vector<1x1x128xf32>
    %113 = arith.mulf %36, %49 : vector<1x1x128xf32>
    %114 = arith.addf %89, %113 : vector<1x1x128xf32>
    %cst_23 = arith.constant 0.899999976 : f32
    %115 = vector.broadcast %cst_23 : f32 to vector<1x1x128xf32>
    %116 = arith.mulf %49, %115 : vector<1x1x128xf32>
    %cst_24 = arith.constant 2.500000e-02 : f32
    %117 = vector.broadcast %cst_24 : f32 to vector<1x1x128xf32>
    %118 = arith.addf %116, %117 : vector<1x1x128xf32>
    %119 = math.absf %36 : vector<1x1x128xf32>
    %cst_25 = arith.constant 0.000000e+00 : f32
    %120 = vector.broadcast %cst_25 : f32 to vector<1x1x128xf32>
    %121 = arith.subf %120, %119 : vector<1x1x128xf32>
    %122 = math.exp %121 : vector<1x1x128xf32>
    %cst_26 = arith.constant 1.000000e+00 : f32
    %123 = vector.broadcast %cst_26 : f32 to vector<1x1x128xf32>
    %124 = arith.addf %123, %122 : vector<1x1x128xf32>
    %125 = math.log %124 : vector<1x1x128xf32>
    %cst_27 = arith.constant 9.99999997E-7 : f32
    %126 = vector.broadcast %cst_27 : f32 to vector<1x1x128xf32>
    %127 = arith.cmpf olt, %122, %126 : vector<1x1x128xf32>
    %128 = arith.select %127, %122, %125 : vector<1x1x128xi1>, vector<1x1x128xf32>
    %cst_28 = arith.constant 0.000000e+00 : f32
    %129 = vector.broadcast %cst_28 : f32 to vector<1x1x128xf32>
    %130 = arith.maximumf %36, %129 : vector<1x1x128xf32>
    %131 = arith.addf %109, %130 : vector<1x1x128xf32>
    %132 = arith.mulf %36, %118 : vector<1x1x128xf32>
    %133 = arith.subf %131, %132 : vector<1x1x128xf32>
    %134 = arith.addf %133, %128 : vector<1x1x128xf32>
    %135 = arith.subf %37, %56 : vector<1x1x128xf32>
    %136 = math.exp %135 : vector<1x1x128xf32>
    %137 = arith.addf %112, %136 : vector<1x1x128xf32>
    %138 = arith.mulf %37, %53 : vector<1x1x128xf32>
    %139 = arith.addf %114, %138 : vector<1x1x128xf32>
    %cst_29 = arith.constant 0.899999976 : f32
    %140 = vector.broadcast %cst_29 : f32 to vector<1x1x128xf32>
    %141 = arith.mulf %53, %140 : vector<1x1x128xf32>
    %cst_30 = arith.constant 2.500000e-02 : f32
    %142 = vector.broadcast %cst_30 : f32 to vector<1x1x128xf32>
    %143 = arith.addf %141, %142 : vector<1x1x128xf32>
    %144 = math.absf %37 : vector<1x1x128xf32>
    %cst_31 = arith.constant 0.000000e+00 : f32
    %145 = vector.broadcast %cst_31 : f32 to vector<1x1x128xf32>
    %146 = arith.subf %145, %144 : vector<1x1x128xf32>
    %147 = math.exp %146 : vector<1x1x128xf32>
    %cst_32 = arith.constant 1.000000e+00 : f32
    %148 = vector.broadcast %cst_32 : f32 to vector<1x1x128xf32>
    %149 = arith.addf %148, %147 : vector<1x1x128xf32>
    %150 = math.log %149 : vector<1x1x128xf32>
    %cst_33 = arith.constant 9.99999997E-7 : f32
    %151 = vector.broadcast %cst_33 : f32 to vector<1x1x128xf32>
    %152 = arith.cmpf olt, %147, %151 : vector<1x1x128xf32>
    %153 = arith.select %152, %147, %150 : vector<1x1x128xi1>, vector<1x1x128xf32>
    %cst_34 = arith.constant 0.000000e+00 : f32
    %154 = vector.broadcast %cst_34 : f32 to vector<1x1x128xf32>
    %155 = arith.maximumf %37, %154 : vector<1x1x128xf32>
    %156 = arith.addf %134, %155 : vector<1x1x128xf32>
    %157 = arith.mulf %37, %143 : vector<1x1x128xf32>
    %158 = arith.subf %156, %157 : vector<1x1x128xf32>
    %159 = arith.addf %158, %153 : vector<1x1x128xf32>
    %160 = math.log %137 : vector<1x1x128xf32>
    %161 = arith.addf %160, %56 : vector<1x1x128xf32>
    %162 = arith.subf %161, %139 : vector<1x1x128xf32>
    %cst_35 = arith.constant 0.000000e+00 : f32
    %163 = vector.broadcast %cst_35 : f32 to vector<1x1x128xf32>
    %164 = arith.select %8, %163, %162 : vector<1x1x128xi1>, vector<1x1x128xf32>
    %165 = tpu.iota {dimensions = array<i32: 0>} : vector<128x128xi32>
    %166 = tpu.iota {dimensions = array<i32: 1>} : vector<128x128xi32>
    %167 = arith.cmpi eq, %165, %166 : vector<128x128xi32>
    %168 = tpu.iota {dimensions = array<i32: 0>} : vector<8x128xi32>
    %169 = tpu.iota {dimensions = array<i32: 1>} : vector<8x128xi32>
    %cst_36 = arith.constant 0.000000e+00 : f32
    %170 = vector.broadcast %cst_36 : f32 to vector<8x128xf32>
    %171 = vector.shape_cast %164 : vector<1x1x128xf32> to vector<1x128xf32>
    %172 = vector.shape_cast %171 : vector<1x128xf32> to vector<1x128xf32>
    %173 = vector.broadcast %172 : vector<1x128xf32> to vector<128x128xf32>
    %cst_37 = arith.constant 0.000000e+00 : f32
    %174 = vector.broadcast %cst_37 : f32 to vector<128x128xf32>
    %175 = arith.select %167, %173, %174 : vector<128x128xi1>, vector<128x128xf32>
    %cst_38 = arith.constant dense<0.000000e+00> : vector<128xf32>
    %176 = vector.multi_reduction <add>, %175, %cst_38 [1] : vector<128x128xf32> to vector<128xf32>
    %177 = vector.shape_cast %176 : vector<128xf32> to vector<128x1xf32>
    %178 = vector.broadcast %177 : vector<128x1xf32> to vector<128x128xf32>
    %179 = vector.broadcast %171 : vector<1x128xf32> to vector<128x128xf32>
    %180 = arith.cmpf ogt, %178, %179 : vector<128x128xf32>
    %181 = vector.broadcast %177 : vector<128x1xf32> to vector<128x128xf32>
    %182 = vector.broadcast %171 : vector<1x128xf32> to vector<128x128xf32>
    %183 = arith.cmpf oeq, %181, %182 : vector<128x128xf32>
    %184 = arith.cmpi slt, %165, %166 : vector<128x128xi32>
    %185 = arith.andi %183, %184 : vector<128x128xi1>
    %186 = arith.ori %180, %185 : vector<128x128xi1>
    %187 = arith.extui %186 : vector<128x128xi1> to vector<128x128xi32>
    %188 = arith.sitofp %187 : vector<128x128xi32> to vector<128x128xf32>
    %cst_39 = arith.constant dense<0.000000e+00> : vector<128xf32>
    %189 = vector.multi_reduction <add>, %188, %cst_39 [0] : vector<128x128xf32> to vector<128xf32>
    %190 = vector.shape_cast %189 : vector<128xf32> to vector<1x128xf32>
    %191 = vector.shape_cast %10 : vector<1x1x128xf32> to vector<1x128xf32>
    %192 = vector.shape_cast %191 : vector<1x128xf32> to vector<1x1x128xf32>
    %cst_40 = arith.constant dense<0.000000e+00> : vector<1xf32>
    %193 = vector.multi_reduction <add>, %192, %cst_40 [1, 2] : vector<1x1x128xf32> to vector<1xf32>
    %194 = vector.shape_cast %193 : vector<1xf32> to vector<1x1x1xf32>
    %195 = vector.extract %194[0, 0, 0] : f32 from vector<1x1x1xf32>
    %cst_41 = arith.constant 3.000000e+00 : f32
    %196 = arith.mulf %cst_41, %195 : f32
    %cst_42 = arith.constant 1.270000e+02 : f32
    %197 = arith.minimumf %196, %cst_42 : f32
    %198 = vector.shape_cast %8 : vector<1x1x128xi1> to vector<1x128xi1>
    %199 = vector.broadcast %197 : f32 to vector<1x128xf32>
    %200 = arith.cmpf olt, %190, %199 : vector<1x128xf32>
    %201 = arith.ori %198, %200 : vector<1x128xi1>
    %202 = arith.extui %201 : vector<1x128xi1> to vector<1x128xi32>
    %203 = arith.sitofp %202 : vector<1x128xi32> to vector<1x128xf32>
    %204 = vector.shape_cast %22 : vector<1x2x128xf32> to vector<2x128xf32>
    %205 = vector.shape_cast %204 : vector<2x128xf32> to vector<1x2x128xf32>
    %cst_43 = arith.constant dense<0.000000e+00> : vector<1xf32>
    %206 = vector.multi_reduction <add>, %205, %cst_43 [1, 2] : vector<1x2x128xf32> to vector<1xf32>
    %207 = vector.shape_cast %206 : vector<1xf32> to vector<1x1x1xf32>
    %208 = vector.extract %207[0, 0, 0] : f32 from vector<1x1x1xf32>
    %209 = vector.shape_cast %159 : vector<1x1x128xf32> to vector<1x128xf32>
    %210 = arith.mulf %209, %203 : vector<1x128xf32>
    %211 = vector.shape_cast %210 : vector<1x128xf32> to vector<1x1x128xf32>
    %cst_44 = arith.constant dense<0.000000e+00> : vector<1xf32>
    %212 = vector.multi_reduction <add>, %211, %cst_44 [1, 2] : vector<1x1x128xf32> to vector<1xf32>
    %213 = vector.shape_cast %212 : vector<1xf32> to vector<1x1x1xf32>
    %214 = vector.extract %213[0, 0, 0] : f32 from vector<1x1x1xf32>
    %215 = vector.shape_cast %33 : vector<1x1x128xf32> to vector<1x128xf32>
    %216 = vector.shape_cast %215 : vector<1x128xf32> to vector<1x1x128xf32>
    %cst_45 = arith.constant dense<0.000000e+00> : vector<1xf32>
    %217 = vector.multi_reduction <add>, %216, %cst_45 [1, 2] : vector<1x1x128xf32> to vector<1xf32>
    %218 = vector.shape_cast %217 : vector<1xf32> to vector<1x1x1xf32>
    %219 = vector.extract %218[0, 0, 0] : f32 from vector<1x1x1xf32>
    %c0_i32_46 = arith.constant 0 : i32
    %220 = vector.broadcast %c0_i32_46 : i32 to vector<8x128xi32>
    %221 = arith.cmpi eq, %168, %220 : vector<8x128xi32>
    %c0_i32_47 = arith.constant 0 : i32
    %222 = vector.broadcast %c0_i32_47 : i32 to vector<8x128xi32>
    %223 = arith.cmpi eq, %169, %222 : vector<8x128xi32>
    %c1_i32_48 = arith.constant 1 : i32
    %224 = vector.broadcast %c1_i32_48 : i32 to vector<8x128xi32>
    %225 = arith.cmpi eq, %169, %224 : vector<8x128xi32>
    %c2_i32_49 = arith.constant 2 : i32
    %226 = vector.broadcast %c2_i32_49 : i32 to vector<8x128xi32>
    %227 = arith.cmpi eq, %169, %226 : vector<8x128xi32>
    %c3_i32_50 = arith.constant 3 : i32
    %228 = vector.broadcast %c3_i32_50 : i32 to vector<8x128xi32>
    %229 = arith.cmpi eq, %169, %228 : vector<8x128xi32>
    %cst_51 = arith.constant 0.000000e+00 : f32
    %230 = vector.broadcast %195 : f32 to vector<8x128xf32>
    %231 = vector.broadcast %cst_51 : f32 to vector<8x128xf32>
    %232 = arith.select %229, %230, %231 : vector<8x128xi1>, vector<8x128xf32>
    %233 = vector.broadcast %219 : f32 to vector<8x128xf32>
    %234 = arith.select %227, %233, %232 : vector<8x128xi1>, vector<8x128xf32>
    %235 = vector.broadcast %214 : f32 to vector<8x128xf32>
    %236 = arith.select %225, %235, %234 : vector<8x128xi1>, vector<8x128xf32>
    %237 = vector.broadcast %208 : f32 to vector<8x128xf32>
    %238 = arith.select %223, %237, %236 : vector<8x128xi1>, vector<8x128xf32>
    %cst_52 = arith.constant 0.000000e+00 : f32
    %239 = vector.broadcast %cst_52 : f32 to vector<8x128xf32>
    %240 = arith.select %221, %238, %239 : vector<8x128xi1>, vector<8x128xf32>
    %241 = arith.addf %170, %240 : vector<8x128xf32>
    %c0_53 = arith.constant 0 : index
    %c0_54 = arith.constant 0 : index
    %c0_55 = arith.constant 0 : index
    %242 = vector.load %arg2[%c0_53, %c0_54, %c0_55] : memref<1x8x128xf32, #tpu.memory_space<vmem>>, vector<1x8x128xf32>
    %243 = vector.shape_cast %242 : vector<1x8x128xf32> to vector<8x128xf32>
    %244 = vector.shape_cast %241 : vector<8x128xf32> to vector<1x8x128xf32>
    tpu.vector_store %arg2[%c0_53, %c0_54, %c0_55], %244 {strides = array<i32>} : memref<1x8x128xf32, #tpu.memory_space<vmem>>, vector<1x8x128xf32>,
    return
  }
  func.func @transform_0(%arg0: i32) -> (i32, i32, i32) {
    %c0_i32 = arith.constant 0 : i32
    %c0_i32_0 = arith.constant 0 : i32
    %c0_i32_1 = arith.constant 0 : i32
    return %arg0, %c0_i32, %c0_i32_0 : i32, i32, i32
  }
  func.func @transform_1(%arg0: i32) -> (i32, i32, i32) {
    %c0_i32 = arith.constant 0 : i32
    %c0_i32_0 = arith.constant 0 : i32
    %c0_i32_1 = arith.constant 0 : i32
    return %arg0, %c0_i32, %c0_i32_0 : i32, i32, i32
  }
}

</mosaic_0001>

<llo_original>
// kernel: multibox_loss_forward.1
$region0: #{multibox_loss_forward.1}
  #allocation0 [shape = 'u32[]', space=smem, size = 0x4, offset = 0x4, fixed_abs, tag = 'smem constant byte address 0x4 - core index']
  #allocation1 [shape = 'u32[144,128]{1,0:T(1,128)}', space=vmem, size = 0x12000, scoped, tag = 'internal scratch']
  %s0 = inlined_call_operand.vmem [shape: f32[2,16,128], index: 0, kind: input, shape index: {}]
  %s1 = inlined_call_operand.vmem [shape: f32[2,8,128], index: 1, kind: output, shape index: {}]
  %s2 = sld [smem:[#allocation0]]
  $region37: #{multibox_loss_forward.1} parent=0
    _
  %s4 = ssub.s32 1, %s2
  %s5 = scalar_select 0, %s4, %s2
  loop: start=0, step=1, limit=4
  $region2: #{multibox_loss_forward.1} parent=0 // loop_pre_header
    _
  $region3: #{multibox_loss_forward.1} parent=0 // loop_header
    %s7 = sphi 0, %s11
    %p8 = scmp.ge.s32.totalorder %s7, 4
    %s17 = sphi 0, %s19
    %s20 = sphi 0, %s17
    %s21 = sphi 0, %s20
    %s37 = sphi 0, %s21
    %s43 = sphi 0, %s45
    %s46 = sphi 0, %s43
    %s47 = sphi 0, %s46
    %s63 = sphi 0, %s47
  $region4: #{multibox_loss_forward.1} parent=0 // loop_header_branch
    %10 = sbr.rel (%p8) target = $region8
  $region5: #{multibox_loss_forward.1} parent=0 // loop_body
    %s12 = ssub.s32 %s7, 1
    %s13 = ssub.s32 %s7, 2
    %s14 = sadd.s32 %s7, 1
    %s15 = ssub.s32 %s7, %s14
    %p16 = scmp.eq.s32.totalorder %s15, 0
    %s18 = sadd.s32 %s17, 1
    %s19 = scalar_select %p16, %s17, %s18
    %p22 = pneg %p16
    %p23 = scmp.eq.s32.totalorder %s7, 1
    %p24 = por %p22, %p23
    %p25 = scmp.ne.s32.totalorder %s17, %s20
    %p26 = scmp.eq.s32.totalorder %s7, 0
    %p27 = por %p25, %p26
    %p28 = scmp.ne.s32.totalorder %s17, %s20
    %p29 = scmp.eq.s32.totalorder %s12, 1
    %p30 = por %p28, %p29
    %p31 = scmp.ne.s32.totalorder %s20, %s21
    %p32 = scmp.eq.s32.totalorder %s12, 0
    %p33 = por %p31, %p32
    %p34 = scmp.ne.s32.totalorder %s20, %s21
    %p35 = scmp.eq.s32.totalorder %s13, 1
    %p36 = por %p34, %p35
    %p38 = scmp.ne.s32.totalorder %s21, %s37
    %p39 = scmp.eq.s32.totalorder %s13, 0
    %p40 = por %p38, %p39
    %s41 = ssub.s32 %s7, %s14
    %p42 = scmp.eq.s32.totalorder %s41, 0
    %s44 = sadd.s32 %s43, 1
    %s45 = scalar_select %p42, %s43, %s44
    %p48 = pneg %p42
    %p49 = scmp.eq.s32.totalorder %s7, 1
    %p50 = por %p48, %p49
    %p51 = scmp.ne.s32.totalorder %s43, %s46
    %p52 = scmp.eq.s32.totalorder %s7, 0
    %p53 = por %p51, %p52
    %p54 = scmp.ne.s32.totalorder %s43, %s46
    %p55 = scmp.eq.s32.totalorder %s12, 1
    %p56 = por %p54, %p55
    %p57 = scmp.ne.s32.totalorder %s46, %s47
    %p58 = scmp.eq.s32.totalorder %s12, 0
    %p59 = por %p57, %p58
    %p60 = scmp.ne.s32.totalorder %s46, %s47
    %p61 = scmp.eq.s32.totalorder %s13, 1
    %p62 = por %p60, %p61
    %p64 = scmp.ne.s32.totalorder %s47, %s63
    %p65 = scmp.eq.s32.totalorder %s13, 0
    %p66 = por %p64, %p65
    %p67 = scmp.le.s32.totalorder 1, %s7
    %p68 = scmp.lt.s32.totalorder %s7, 3
    %p69 = pnand %p67, %p68
    %p70 = pneg %p69
    // Predicated region
    $region9: #{multibox_loss_forward.1} parent=5 // pred_check
      _
    $region10: #{multibox_loss_forward.1} parent=5 // pred_check_branch
      %72 = sbr.rel (%p69) target = $region12
    $region11: #{multibox_loss_forward.1} parent=5 // pred_region
      %s73 = ssub.s32 %s7, 1
    $region12: #{multibox_loss_forward.1} parent=5 // pred_fallthru
      _
    %p74 = scmp.lt.s32.totalorder %s7, 2
    // Predicated region
    $region13: #{multibox_loss_forward.1} parent=5 // pred_check
      %p75 = pneg %p74
    $region14: #{multibox_loss_forward.1} parent=5 // pred_check_branch
      %77 = sbr.rel (%p75) target = $region16
    $region15: #{multibox_loss_forward.1} parent=5 // pred_region
      // Predicated region
      $region17: #{multibox_loss_forward.1} parent=15 // pred_check
        %p78 = pneg %p27
      $region18: #{multibox_loss_forward.1} parent=15 // pred_check_branch
        %80 = sbr.rel (%p78) target = $region20
      $region19: #{multibox_loss_forward.1} parent=15 // pred_region
        %p81 = scmp.lt.s32.totalorder %s7, 1
        %s82 = scalar_select %p81, %s7, 1
        %s83 = smul.addr %s82, 2
        %s84 = smul.addr %s83, 8
        %s85 = scalar_lea.vmem %s0, %s84
      $region20: #{multibox_loss_forward.1} parent=15 // pred_fallthru
        _
    $region16: #{multibox_loss_forward.1} parent=5 // pred_fallthru
      _
    %p86 = scmp.le.s32.totalorder 1, %s7
    %p87 = scmp.lt.s32.totalorder %s7, 3
    %p88 = pnand %p86, %p87
    %p89 = pneg %p88
    // Predicated region
    $region21: #{multibox_loss_forward.1} parent=5 // pred_check
      _
    $region22: #{multibox_loss_forward.1} parent=5 // pred_check_branch
      %91 = sbr.rel (%p88) target = $region24
    $region23: #{multibox_loss_forward.1} parent=5 // pred_region
      %s92 = ssub.s32 %s7, 1
      %p93 = scmp.lt.s32.totalorder %s12, 1
      %s94 = scalar_select %p93, %s12, 1
      %s95 = smul.addr %s94, 2
      %s96 = smul.addr %s95, 8
      %s97 = scalar_lea.vmem %s0, %s96
      %p98 = pneg %p33
      %p99 = pneg %p30
      %p100 = pneg %p59
      %p101 = pneg %p56
      %p102 = scmp.lt.s32.totalorder %s12, 1
      %s103 = scalar_select %p102, %s12, 1
      %s104 = smul.addr %s103, 8
      %s105 = scalar_lea.vmem %s1, %s104
      %p106 = scmp.lt.s32.totalorder %s12, 1
      %s107 = scalar_select %p106, %s12, 1
      %s108 = smul.addr %s107, 2
      %s109 = smul.addr %s108, 8
      %s110 = scalar_lea.vmem %s0, %s109
      %p111 = scmp.lt.s32.totalorder %s12, 1
      %s112 = scalar_select %p111, %s12, 1
      %s113 = smul.addr %s112, 8
      %s114 = scalar_lea.vmem %s1, %s113
      %v115 = vld [vmem:[%s110] sm:$0xff]
      %v116 = vld [vmem:[%s110 + $0x8] sm:$0xff]
      %v117 = vcvt.f32.s32.to.zero.pseudo %v116
      %vm118 = vcmp.gt.s32.totalorder %v117, 0
      %v119 = vsel %vm118, 1, 0
      %v120 = vcvt.s32.f32 %v119
      %v122 = vrot.slane %v115, 2
      %v124 = vsub.f32 %v115, %v122
      %v125 = vand.u32 2147483647, %v124
      %vm126 = vcmp.lt.f32.partialorder %v125, 1.0
      %v127 = vmul.f32 %v124, 0.5
      %v128 = vmul.f32 %v127, %v124
      %v129 = vsub.f32 %v125, 0.5
      %v130 = vsel %vm126, %v128, %v129
      %v131 = vlaneseq
      %v132 = vshrl.u32 %v131, 7
      %v133 = vsub.s32 2, %v132
      %v134 = vrot.slane %v120, %v133
      %v135 = vmul.f32 %v130, %v134
      %v137 = vrot.slane %v116, 1
      %v139 = vsub.f32 %v116, %v137
      %v140 = vand.u32 2147483647, %v139
      %vm141 = vcmp.lt.f32.partialorder %v140, 1.0
      %v142 = vmul.f32 %v139, 0.5
      %v143 = vmul.f32 %v142, %v139
      %v144 = vsub.f32 %v140, 0.5
      %v145 = vsel %vm141, %v143, %v144
      %v147 = vrot.slane %v120, 2
      %v149 = vmul.f32 %v145, %v147
      %vm150 = vcmp.eq.s32.totalorder %v117, 0
      %v151 = vsel %vm150, 1, 0
      %v152 = vcvt.s32.f32 %v151
      %vm153 = vcmp.eq.s32.totalorder %v117, 1
      %v154 = vsel %vm153, 1, 0
      %v155 = vcvt.s32.f32 %v154
      %vm156 = vcmp.eq.s32.totalorder %v117, 2
      %v157 = vsel %vm156, 1, 0
      %v158 = vcvt.s32.f32 %v157
      %vm159 = vcmp.eq.s32.totalorder %v117, 3
      %v160 = vsel %vm159, 1, 0
      %v161 = vcvt.s32.f32 %v160
      %v162 = vrot.slane %v115, 1
      %v164 = vmax.f32 %v115, %v162
      %v165 = vmax.f32 %v164, %v122
      %v166 = vrot.slane %v115, 3
      %v168 = vmax.f32 %v165, %v166
      %v169 = vsub.f32 %v115, %v168
      %v170 = vmul.f32 %v169, 1.442695
      %v171 = vpow.pop %v170
      %v172 = vadd.f32 %v171, 0.0
      %v174 = vrot.slane %v152, 2
      %v176 = vmul.f32 %v115, %v174
      %v177 = vadd.f32 %v176, 0.0
      %v178 = vmul.f32 %v152, 0.9
      %v179 = vadd.f32 %v178, 0.025
      %v180 = vand.u32 2147483647, %v115
      %v181 = vsub.f32 0.0, %v180
      %v182 = vmul.f32 %v181, 1.442695
      %v183 = vpow.pop %v182
      %v184 = vadd.f32 %v183, 1.0
      %v185 = vlog2.pop %v184
      %v186 = vmul.f32 %v185, 0.6931472
      %vm187 = vcmp.lt.f32.partialorder %v183, 1e-06
      %v188 = vsel %vm187, %v183, %v186
      %v189 = vmax.f32 %v115, 0.0
      %v190 = vadd.f32 %v189, 0.0
      %v192 = vrot.slane %v179, 2
      %v194 = vmul.f32 %v115, %v192
      %v195 = vsub.f32 %v190, %v194
      %v196 = vadd.f32 %v195, %v188
      %v198 = vrot.slane %v168, 7
      %v200 = vsub.f32 %v115, %v198
      %v201 = vmul.f32 %v200, 1.442695
      %v202 = vpow.pop %v201
      %v204 = vrot.slane %v202, 1
      %v206 = vadd.f32 %v172, %v204
      %v208 = vrot.slane %v155, 1
      %v210 = vmul.f32 %v115, %v208
      %v212 = vrot.slane %v210, 1
      %v214 = vadd.f32 %v177, %v212
      %v215 = vmul.f32 %v155, 0.9
      %v216 = vadd.f32 %v215, 0.025
      %v218 = vrot.slane %v189, 1
      %v220 = vadd.f32 %v196, %v218
      %v222 = vrot.slane %v216, 1
      %v224 = vmul.f32 %v115, %v222
      %v226 = vrot.slane %v224, 1
      %v228 = vsub.f32 %v220, %v226
      %v230 = vrot.slane %v188, 1
      %v232 = vadd.f32 %v228, %v230
      %v233 = vrot.slane %v168, 6
      %v235 = vsub.f32 %v115, %v233
      %v236 = vmul.f32 %v235, 1.442695
      %v237 = vpow.pop %v236
      %v239 = vrot.slane %v237, 2
      %v241 = vadd.f32 %v206, %v239
      %v242 = vmul.f32 %v115, %v158
      %v244 = vrot.slane %v242, 2
      %v246 = vadd.f32 %v214, %v244
      %v247 = vmul.f32 %v158, 0.9
      %v248 = vadd.f32 %v247, 0.025
      %v249 = vrot.slane %v189, 2
      %v251 = vadd.f32 %v232, %v249
      %v252 = vmul.f32 %v115, %v248
      %v254 = vrot.slane %v252, 2
      %v256 = vsub.f32 %v251, %v254
      %v257 = vrot.slane %v188, 2
      %v259 = vadd.f32 %v256, %v257
      %v260 = vrot.slane %v168, 5
      %v262 = vsub.f32 %v115, %v260
      %v263 = vmul.f32 %v262, 1.442695
      %v264 = vpow.pop %v263
      %v266 = vrot.slane %v264, 3
      %v268 = vadd.f32 %v241, %v266
      %v270 = vrot.slane %v161, 7
      %v272 = vmul.f32 %v115, %v270
      %v274 = vrot.slane %v272, 3
      %v276 = vadd.f32 %v246, %v274
      %v277 = vmul.f32 %v161, 0.9
      %v278 = vadd.f32 %v277, 0.025
      %v279 = vrot.slane %v189, 3
      %v281 = vadd.f32 %v259, %v279
      %v283 = vrot.slane %v278, 7
      %v285 = vmul.f32 %v115, %v283
      %v287 = vrot.slane %v285, 3
      %v289 = vsub.f32 %v281, %v287
      %v290 = vrot.slane %v188, 3
      %v292 = vadd.f32 %v289, %v290
      %v293 = vlog2.pop %v268
      %v294 = vmul.f32 %v293, 0.6931472
      %v295 = vadd.f32 %v294, %v168
      %v296 = vsub.f32 %v295, %v276
      %v298 = vrot.slane %v296, 6
      %v300 = vsel %vm118, 0.0, %v298
      %v301 = vlaneseq
      %v302 = vshrl.u32 %v301, 7
      %v303 = vadd.s32 %v302, 8
      %v304 = vadd.s32 %v302, 16
      %v305 = vadd.s32 %v302, 24
      %v306 = vadd.s32 %v302, 32
      %v307 = vadd.s32 %v302, 40
      %v308 = vadd.s32 %v302, 48
      %v309 = vadd.s32 %v302, 56
      %v310 = vadd.s32 %v302, 64
      %v311 = vadd.s32 %v302, 72
      %v312 = vadd.s32 %v302, 80
      %v313 = vadd.s32 %v302, 88
      %v314 = vadd.s32 %v302, 96
      %v315 = vadd.s32 %v302, 104
      %v316 = vadd.s32 %v302, 112
      %v317 = vadd.s32 %v302, 120
      %v318 = vlaneseq
      %v319 = vand.u32 %v318, 127
      %vm320 = vcmp.eq.s32.totalorder %v302, %v319
      %vm321 = vcmp.eq.s32.totalorder %v303, %v319
      %vm322 = vcmp.eq.s32.totalorder %v304, %v319
      %vm323 = vcmp.eq.s32.totalorder %v305, %v319
      %vm324 = vcmp.eq.s32.totalorder %v306, %v319
      %vm325 = vcmp.eq.s32.totalorder %v307, %v319
      %vm326 = vcmp.eq.s32.totalorder %v308, %v319
      %vm327 = vcmp.eq.s32.totalorder %v309, %v319
      %vm328 = vcmp.eq.s32.totalorder %v310, %v319
      %vm329 = vcmp.eq.s32.totalorder %v311, %v319
      %vm330 = vcmp.eq.s32.totalorder %v312, %v319
      %vm331 = vcmp.eq.s32.totalorder %v313, %v319
      %vm332 = vcmp.eq.s32.totalorder %v314, %v319
      %vm333 = vcmp.eq.s32.totalorder %v315, %v319
      %vm334 = vcmp.eq.s32.totalorder %v316, %v319
      %vm335 = vcmp.eq.s32.totalorder %v317, %v319
      %v336 = vlaneseq
      %v337 = vshrl.u32 %v336, 7
      %v338 = vsub.s32 2, %v337
      %v339 = vrot.slane %v300, %v338
      %v340 = vsel %vm320, %v339, 0.0
      %v341 = vsel %vm321, %v339, 0.0
      %v342 = vsel %vm322, %v339, 0.0
      %v343 = vsel %vm323, %v339, 0.0
      %v344 = vsel %vm324, %v339, 0.0
      %v345 = vsel %vm325, %v339, 0.0
      %v346 = vsel %vm326, %v339, 0.0
      %v347 = vsel %vm327, %v339, 0.0
      %v348 = vsel %vm328, %v339, 0.0
      %v349 = vsel %vm329, %v339, 0.0
      %v350 = vsel %vm330, %v339, 0.0
      %v351 = vsel %vm331, %v339, 0.0
      %v352 = vsel %vm332, %v339, 0.0
      %v353 = vsel %vm333, %v339, 0.0
      %v354 = vsel %vm334, %v339, 0.0
      %v355 = vsel %vm335, %v339, 0.0
      %356 = vadd.xlane.f32.xlu0 %v340
      %v357 = vpop.xlane.xlu0 %356
      %358 = vadd.xlane.f32.xlu0 %v341
      %v359 = vpop.xlane.xlu0 %358
      %360 = vadd.xlane.f32.xlu0 %v342
      %v361 = vpop.xlane.xlu0 %360
      %362 = vadd.xlane.f32.xlu0 %v343
      %v363 = vpop.xlane.xlu0 %362
      %364 = vadd.xlane.f32.xlu0 %v344
      %v365 = vpop.xlane.xlu0 %364
      %366 = vadd.xlane.f32.xlu0 %v345
      %v367 = vpop.xlane.xlu0 %366
      %368 = vadd.xlane.f32.xlu0 %v346
      %v369 = vpop.xlane.xlu0 %368
      %370 = vadd.xlane.f32.xlu0 %v347
      %v371 = vpop.xlane.xlu0 %370
      %372 = vadd.xlane.f32.xlu0 %v348
      %v373 = vpop.xlane.xlu0 %372
      %374 = vadd.xlane.f32.xlu0 %v349
      %v375 = vpop.xlane.xlu0 %374
      %376 = vadd.xlane.f32.xlu0 %v350
      %v377 = vpop.xlane.xlu0 %376
      %378 = vadd.xlane.f32.xlu0 %v351
      %v379 = vpop.xlane.xlu0 %378
      %380 = vadd.xlane.f32.xlu0 %v352
      %v381 = vpop.xlane.xlu0 %380
      %382 = vadd.xlane.f32.xlu0 %v353
      %v383 = vpop.xlane.xlu0 %382
      %384 = vadd.xlane.f32.xlu0 %v354
      %v385 = vpop.xlane.xlu0 %384
      %386 = vadd.xlane.f32.xlu0 %v355
      %v387 = vpop.xlane.xlu0 %386
      %vm388 = vcmp.gt.f32.partialorder %v357, %v339
      %vm389 = vcmp.gt.f32.partialorder %v359, %v339
      %vm390 = vcmp.gt.f32.partialorder %v361, %v339
      %vm391 = vcmp.gt.f32.partialorder %v363, %v339
      %vm392 = vcmp.gt.f32.partialorder %v365, %v339
      %vm393 = vcmp.gt.f32.partialorder %v367, %v339
      %vm394 = vcmp.gt.f32.partialorder %v369, %v339
      %vm395 = vcmp.gt.f32.partialorder %v371, %v339
      %vm396 = vcmp.gt.f32.partialorder %v373, %v339
      %vm397 = vcmp.gt.f32.partialorder %v375, %v339
      %vm398 = vcmp.gt.f32.partialorder %v377, %v339
      %vm399 = vcmp.gt.f32.partialorder %v379, %v339
      %vm400 = vcmp.gt.f32.partialorder %v381, %v339
      %vm401 = vcmp.gt.f32.partialorder %v383, %v339
      %vm402 = vcmp.gt.f32.partialorder %v385, %v339
      %vm403 = vcmp.gt.f32.partialorder %v387, %v339
      %vm404 = vcmp.eq.f32.partialorder %v357, %v339
      %vm405 = vcmp.eq.f32.partialorder %v359, %v339
      %vm406 = vcmp.eq.f32.partialorder %v361, %v339
      %vm407 = vcmp.eq.f32.partialorder %v363, %v339
      %vm408 = vcmp.eq.f32.partialorder %v365, %v339
      %vm409 = vcmp.eq.f32.partialorder %v367, %v339
      %vm410 = vcmp.eq.f32.partialorder %v369, %v339
      %vm411 = vcmp.eq.f32.partialorder %v371, %v339
      %vm412 = vcmp.eq.f32.partialorder %v373, %v339
      %vm413 = vcmp.eq.f32.partialorder %v375, %v339
      %vm414 = vcmp.eq.f32.partialorder %v377, %v339
      %vm415 = vcmp.eq.f32.partialorder %v379, %v339
      %vm416 = vcmp.eq.f32.partialorder %v381, %v339
      %vm417 = vcmp.eq.f32.partialorder %v383, %v339
      %vm418 = vcmp.eq.f32.partialorder %v385, %v339
      %vm419 = vcmp.eq.f32.partialorder %v387, %v339
      %vm420 = vcmp.lt.s32.totalorder %v302, %v319
      %vm421 = vcmp.lt.s32.totalorder %v303, %v319
      %vm422 = vcmp.lt.s32.totalorder %v304, %v319
      %vm423 = vcmp.lt.s32.totalorder %v305, %v319
      %vm424 = vcmp.lt.s32.totalorder %v306, %v319
      %vm425 = vcmp.lt.s32.totalorder %v307, %v319
      %vm426 = vcmp.lt.s32.totalorder %v308, %v319
      %vm427 = vcmp.lt.s32.totalorder %v309, %v319
      %vm428 = vcmp.lt.s32.totalorder %v310, %v319
      %vm429 = vcmp.lt.s32.totalorder %v311, %v319
      %vm430 = vcmp.lt.s32.totalorder %v312, %v319
      %vm431 = vcmp.lt.s32.totalorder %v313, %v319
      %vm432 = vcmp.lt.s32.totalorder %v314, %v319
      %vm433 = vcmp.lt.s32.totalorder %v315, %v319
      %vm434 = vcmp.lt.s32.totalorder %v316, %v319
      %vm435 = vcmp.lt.s32.totalorder %v317, %v319
      %vm436 = vmand %vm404, %vm420
      %vm437 = vmand %vm405, %vm421
      %vm438 = vmand %vm406, %vm422
      %vm439 = vmand %vm407, %vm423
      %vm440 = vmand %vm408, %vm424
      %vm441 = vmand %vm409, %vm425
      %vm442 = vmand %vm410, %vm426
      %vm443 = vmand %vm411, %vm427
      %vm444 = vmand %vm412, %vm428
      %vm445 = vmand %vm413, %vm429
      %vm446 = vmand %vm414, %vm430
      %vm447 = vmand %vm415, %vm431
      %vm448 = vmand %vm416, %vm432
      %vm449 = vmand %vm417, %vm433
      %vm450 = vmand %vm418, %vm434
      %vm451 = vmand %vm419, %vm435
      %vm452 = vmor %vm388, %vm436
      %vm453 = vmor %vm389, %vm437
      %vm454 = vmor %vm390, %vm438
      %vm455 = vmor %vm391, %vm439
      %vm456 = vmor %vm392, %vm440
      %vm457 = vmor %vm393, %vm441
      %vm458 = vmor %vm394, %vm442
      %vm459 = vmor %vm395, %vm443
      %vm460 = vmor %vm396, %vm444
      %vm461 = vmor %vm397, %vm445
      %vm462 = vmor %vm398, %vm446
      %vm463 = vmor %vm399, %vm447
      %vm464 = vmor %vm400, %vm448
      %vm465 = vmor %vm401, %vm449
      %vm466 = vmor %vm402, %vm450
      %vm467 = vmor %vm403, %vm451
      %v468 = vsel %vm452, 1, 0
      %v469 = vsel %vm453, 1, 0
      %v470 = vsel %vm454, 1, 0
      %v471 = vsel %vm455, 1, 0
      %v472 = vsel %vm456, 1, 0
      %v473 = vsel %vm457, 1, 0
      %v474 = vsel %vm458, 1, 0
      %v475 = vsel %vm459, 1, 0
      %v476 = vsel %vm460, 1, 0
      %v477 = vsel %vm461, 1, 0
      %v478 = vsel %vm462, 1, 0
      %v479 = vsel %vm463, 1, 0
      %v480 = vsel %vm464, 1, 0
      %v481 = vsel %vm465, 1, 0
      %v482 = vsel %vm466, 1, 0
      %v483 = vsel %vm467, 1, 0
      %v484 = vcvt.s32.f32 %v468
      %v485 = vcvt.s32.f32 %v469
      %v486 = vcvt.s32.f32 %v470
      %v487 = vcvt.s32.f32 %v471
      %v488 = vcvt.s32.f32 %v472
      %v489 = vcvt.s32.f32 %v473
      %v490 = vcvt.s32.f32 %v474
      %v491 = vcvt.s32.f32 %v475
      %v492 = vcvt.s32.f32 %v476
      %v493 = vcvt.s32.f32 %v477
      %v494 = vcvt.s32.f32 %v478
      %v495 = vcvt.s32.f32 %v479
      %v496 = vcvt.s32.f32 %v480
      %v497 = vcvt.s32.f32 %v481
      %v498 = vcvt.s32.f32 %v482
      %v499 = vcvt.s32.f32 %v483
      %v500 = vadd.f32 %v484, %v485
      %v501 = vadd.f32 %v500, %v486
      %v502 = vadd.f32 %v501, %v487
      %v503 = vadd.f32 %v502, %v488
      %v504 = vadd.f32 %v503, %v489
      %v505 = vadd.f32 %v504, %v490
      %v506 = vadd.f32 %v505, %v491
      %v507 = vadd.f32 %v506, %v492
      %v508 = vadd.f32 %v507, %v493
      %v509 = vadd.f32 %v508, %v494
      %v510 = vadd.f32 %v509, %v495
      %v511 = vadd.f32 %v510, %v496
      %v512 = vadd.f32 %v511, %v497
      %v513 = vadd.f32 %v512, %v498
      %v514 = vadd.f32 %v513, %v499
      %v515 = vrot.slane %v514, 4
      %v516 = vadd.f32 %v514, %v515
      %v517 = vrot.slane %v516, 2
      %v518 = vadd.f32 %v516, %v517
      %v519 = vrot.slane %v518, 1
      %v520 = vadd.f32 %v518, %v519
      %vm521 = vcmask 1040384
      %v522 = vsel %vm521, %v147, 0.0
      %523 = vadd.xlane.f32.xlu0 %v522
      %v524 = vpop.xlane.xlu0 %523
      %v525 = vrot.slane %v524, 4
      %v526 = vadd.f32 %v524, %v525
      %v527 = vrot.slane %v526, 2
      %v528 = vadd.f32 %v526, %v527
      %v529 = vrot.slane %v528, 1
      %v530 = vadd.f32 %v528, %v529
      %s531 = vtos %v530
      %s532 = smul.f32 %s531, 3.0
      %s533 = smin.f32 %s532, 127.0
      %v534 = vstv %s533
      %vm535 = vcmp.lt.f32.partialorder %v520, %v534
      %vm536 = vmor %vm118, %vm535
      %v537 = vsel %vm536, 1, 0
      %v538 = vcvt.s32.f32 %v537
      %v540 = vrot.slane %v135, 4
      %vm542 = vcmask 1041408
      %v543 = vsel %vm542, %v540, 0.0
      %544 = vadd.xlane.f32.xlu0 %v543
      %v545 = vpop.xlane.xlu0 %544
      %v546 = vrot.slane %v545, 4
      %v547 = vadd.f32 %v545, %v546
      %v548 = vrot.slane %v547, 2
      %v549 = vadd.f32 %v547, %v548
      %v550 = vrot.slane %v549, 1
      %v551 = vadd.f32 %v549, %v550
      %s552 = vtos %v551
      %v554 = vrot.slane %v538, 2
      %v556 = vmul.f32 %v292, %v554
      %v557 = vsel %vm521, %v556, 0.0
      %558 = vadd.xlane.f32.xlu0 %v557
      %v559 = vpop.xlane.xlu0 %558
      %v560 = vrot.slane %v559, 4
      %v561 = vadd.f32 %v559, %v560
      %v562 = vrot.slane %v561, 2
      %v563 = vadd.f32 %v561, %v562
      %v564 = vrot.slane %v563, 1
      %v565 = vadd.f32 %v563, %v564
      %s566 = vtos %v565
      %v567 = vsel %vm521, %v149, 0.0
      %568 = vadd.xlane.f32.xlu0 %v567
      %v569 = vpop.xlane.xlu0 %568
      %v570 = vrot.slane %v569, 4
      %v571 = vadd.f32 %v569, %v570
      %v572 = vrot.slane %v571, 2
      %v573 = vadd.f32 %v571, %v572
      %v574 = vrot.slane %v573, 1
      %v575 = vadd.f32 %v573, %v574
      %s576 = vtos %v575
      %vm577 = vcmp.eq.s32.totalorder %v302, 0
      %vm578 = vcmp.eq.s32.totalorder %v319, 0
      %vm579 = vcmp.eq.s32.totalorder %v319, 1
      %vm580 = vcmp.eq.s32.totalorder %v319, 2
      %vm581 = vcmp.eq.s32.totalorder %v319, 3
      %v582 = vstv %s531
      %v583 = vsel %vm581, %v582, 0.0
      %v584 = vstv %s576
      %v585 = vsel %vm580, %v584, %v583
      %v586 = vstv %s566
      %v587 = vsel %vm579, %v586, %v585
      %v588 = vstv %s552
      %v589 = vsel %vm578, %v588, %v587
      %v590 = vsel %vm577, %v589, 0.0
      %v591 = vadd.f32 %v590, 0.0
      %592 = vst [vmem:[%s114] sm:$0xff] %v591
      %p593 = scmp.lt.s32.totalorder %s12, 1
      %s594 = scalar_select %p593, %s12, 1
      %s595 = smul.addr %s594, 8
      %s596 = scalar_lea.vmem %s1, %s595
      // Predicated region
      $region25: #{multibox_loss_forward.1} parent=23 // pred_check
        %p597 = pneg %p56
      $region26: #{multibox_loss_forward.1} parent=23 // pred_check_branch
        %599 = sbr.rel (%p597) target = $region28
      $region27: #{multibox_loss_forward.1} parent=23 // pred_region
        _
      $region28: #{multibox_loss_forward.1} parent=23 // pred_fallthru
        _
    $region24: #{multibox_loss_forward.1} parent=5 // pred_fallthru
      _
    %p600 = scmp.le.s32.totalorder 2, %s7
    // Predicated region
    $region29: #{multibox_loss_forward.1} parent=5 // pred_check
      %p601 = pneg %p600
    $region30: #{multibox_loss_forward.1} parent=5 // pred_check_branch
      %603 = sbr.rel (%p601) target = $region32
    $region31: #{multibox_loss_forward.1} parent=5 // pred_region
      %s604 = ssub.s32 %s7, 2
      // Predicated region
      $region33: #{multibox_loss_forward.1} parent=31 // pred_check
        %p605 = pneg %p62
      $region34: #{multibox_loss_forward.1} parent=31 // pred_check_branch
        %607 = sbr.rel (%p605) target = $region36
      $region35: #{multibox_loss_forward.1} parent=31 // pred_region
        %p608 = scmp.lt.s32.totalorder %s13, 1
        %s609 = scalar_select %p608, %s13, 1
        %s610 = smul.addr %s609, 8
        %s611 = scalar_lea.vmem %s1, %s610
      $region36: #{multibox_loss_forward.1} parent=31 // pred_fallthru
        _
    $region32: #{multibox_loss_forward.1} parent=5 // pred_fallthru
      _
  $region6: #{multibox_loss_forward.1} parent=0 // loop_footer
    %s11 = sadd.s32 1, %s7
  $region7: #{multibox_loss_forward.1} parent=0 // loop_footer_branch
    %6 = sbr.rel target = $region3
  $region8: #{multibox_loss_forward.1} parent=0 // loop_exit
    _

</llo_original>
